<compile_context>
chip_gen: v5e
topology: v5e:2x2
jax: 0.10.0
libtpu: 0.0.40
codegen_flags: <defaults>
</compile_context>

<pallas_src>
import jax
import jax.numpy as jnp
from jax.experimental import pallas as pl
from jax.experimental.pallas import tpu as pltpu

LANE = 128      # hidden dim padded to lane width -> lane-dense MXU tiles
SUBLANE = 8     # batch tiles are multiples of the sublane count
MAX_TILE_B = 8192


def _round_up(n, m):
    return ((n + m - 1) // m) * m


# ----------------------------------------------------------------------------
# Kernel: fused (Linear -> ReLU) x2 -> Linear on one batch tile.
# bf16 operands on the MXU, f32 accumulation, f32 bias+ReLU on the VPU.
# ----------------------------------------------------------------------------
def _mlp_policy_kernel(x_ref, w1_ref, b1_ref, w2_ref, b2_ref, w3_ref, b3_ref,
                       o_ref):
    x = x_ref[...].astype(w1_ref.dtype)          # in-kernel bf16 cast (no extra HBM pass)
    h = jnp.dot(x, w1_ref[...],
                preferred_element_type=jnp.float32) + b1_ref[...]
    h = jnp.maximum(h, 0.0)
    h = jnp.dot(h.astype(w2_ref.dtype), w2_ref[...],
                preferred_element_type=jnp.float32) + b2_ref[...]
    h = jnp.maximum(h, 0.0)
    out = jnp.dot(h.astype(w3_ref.dtype), w3_ref[...],
                  preferred_element_type=jnp.float32) + b3_ref[...]
    o_ref[...] = out.astype(o_ref.dtype)


# ----------------------------------------------------------------------------
# One-time parameter preprocessing (hoisted out of the hot path):
#   PyTorch (out, in) -> (in, out) transpose, hidden dim zero-padded to 128,
#   weights cast to bf16 (biases stay f32).  in_dim / act_dim remain unpadded
#   (they map to full-extent block dims, so no 128 padding is required).
# ----------------------------------------------------------------------------
def prepare_params(params, weight_dtype=jnp.bfloat16):
    w1, b1 = params["w1"], params["b1"]
    w2, b2 = params["w2"], params["b2"]
    w3, b3 = params["w3"], params["b3"]
    in_dim, hidden, act_dim = w1.shape[1], w1.shape[0], w3.shape[0]
    hid_p = _round_up(hidden, LANE)

    def pad2(a, r, c):
        return jnp.pad(a, ((0, r - a.shape[0]), (0, c - a.shape[1])))

    def pad1(a, c):
        return jnp.pad(a, (0, c - a.shape[0])).reshape(1, c)

    return {
        "w1": pad2(w1.T, in_dim, hid_p).astype(weight_dtype),   # (in_dim, hid_p)
        "b1": pad1(b1, hid_p).astype(jnp.float32),              # (1, hid_p)
        "w2": pad2(w2.T, hid_p, hid_p).astype(weight_dtype),    # (hid_p, hid_p)
        "b2": pad1(b2, hid_p).astype(jnp.float32),              # (1, hid_p)
        "w3": pad2(w3.T, hid_p, act_dim).astype(weight_dtype),  # (hid_p, act_dim)
        "b3": b3.reshape(1, act_dim).astype(jnp.float32),       # (1, act_dim)
        "dims": (in_dim, hidden, act_dim, hid_p),
    }


def _pick_tile_b(in_dim, hid_p, act_dim):
    """VMEM-aware batch tile, accounting for 2x pipeline double-buffering."""
    try:
        vmem = int(pltpu.get_tpu_info().vmem_capacity_bytes)
    except Exception:  # conservative fallback
        vmem = 64 << 20
    # 48 MiB cap: safe per-TensorCore even if v7x reports per-chip (128 MiB) VMEM.
    budget = min((vmem * 3) // 4, 48 << 20)
    # every input block is double-buffered by the pipeline, weights included
    weight_bytes = 2 * ((in_dim * hid_p + hid_p * hid_p + hid_p * act_dim) * 2
                        + (2 * hid_p + act_dim) * 4)
    # per batch row: 2x-buffered f32 x / f32 out blocks + f32+bf16 intermediates
    per_row = 2 * (in_dim * 4 + act_dim * 4) + 2 * hid_p * (4 + 2)
    tile = (budget - weight_bytes) // max(per_row, 1)
    tile = max(SUBLANE, min(MAX_TILE_B, int(tile)))
    return (tile // SUBLANE) * SUBLANE, int(budget)


def _xla_forward(x, prep):
    """Small-batch fast path: plain XLA dot chain (same bf16/f32 recipe)."""
    h = jnp.dot(x.astype(jnp.bfloat16), prep["w1"],
                preferred_element_type=jnp.float32) + prep["b1"]
    h = jnp.maximum(h, 0.0)
    h = jnp.dot(h.astype(jnp.bfloat16), prep["w2"],
                preferred_element_type=jnp.float32) + prep["b2"]
    h = jnp.maximum(h, 0.0)
    return jnp.dot(h.astype(jnp.bfloat16), prep["w3"],
                   preferred_element_type=jnp.float32) + prep["b3"]


# ----------------------------------------------------------------------------
# Wrapper: batch-pad, launch the batch-gridded pallas_call, slice batch pad.
# ----------------------------------------------------------------------------
def policy_head_forward(x, prep, *, min_pallas_batch=256):
    in_dim, hidden, act_dim, hid_p = prep["dims"]
    B = x.shape[0]

    if B < min_pallas_batch:
        # RL-inference regime (B ~ 2): pallas_call launch + padding not worth it.
        return _xla_forward(x, prep)

    tile_b, vmem_budget = _pick_tile_b(in_dim, hid_p, act_dim)
    # Guarantee >= 2 grid steps for large B so v7x's two TensorCores both work.
    half_b = max(SUBLANE, _round_up(-(-B // 2), SUBLANE))
    tile_b = max(SUBLANE, min(tile_b, half_b))
    B_pad = _round_up(B, tile_b)

    x_p = x if B_pad == B else jnp.pad(x, ((0, B_pad - B), (0, 0)))

    weights = (prep["w1"], prep["b1"], prep["w2"], prep["b2"],
               prep["w3"], prep["b3"])
    w_total_bytes = sum(int(w.size) * w.dtype.itemsize for w in weights)
    cost = pl.CostEstimate(
        flops=2 * B_pad * (in_dim * hid_p + hid_p * hid_p + hid_p * act_dim),
        transcendentals=0,
        bytes_accessed=B_pad * in_dim * 4 + w_total_bytes + B_pad * act_dim * 4,
    )

    def const(shape):
        # Constant block index -> Pallas keeps these VMEM-resident (no re-DMA).
        return pl.BlockSpec(shape, lambda i: (0, 0))

    out_padded = pl.pallas_call(
        _mlp_policy_kernel,
        out_shape=jax.ShapeDtypeStruct((B_pad, act_dim), jnp.float32),
        grid=(B_pad // tile_b,),
        in_specs=[
            pl.BlockSpec((tile_b, in_dim), lambda i: (i, 0)),  # x: tiled over batch
            const((in_dim, hid_p)), const((1, hid_p)),         # w1, b1 (resident)
            const((hid_p, hid_p)), const((1, hid_p)),          # w2, b2 (resident)
            const((hid_p, act_dim)), const((1, act_dim)),      # w3, b3 (resident)
        ],
        out_specs=pl.BlockSpec((tile_b, act_dim), lambda i: (i, 0)),
        compiler_params=pltpu.CompilerParams(
            dimension_semantics=("parallel",),   # megacore / v7x dual-TC sharding
            vmem_limit_bytes=vmem_budget,
        ),
        cost_estimate=cost,
    )(x_p, *weights)

    return out_padded if B_pad == B else out_padded[:B]


def init_params(key, in_dim, hidden, act_dim):
    """Deterministic synthetic init (PyTorch Linear weight shapes)."""
    k1, k2, k3, k4, k5, k6 = jax.random.split(key, 6)
    s1 = 1.0 / jnp.sqrt(in_dim)
    s2 = 1.0 / jnp.sqrt(hidden)
    return {
        "w1": jax.random.uniform(k1, (hidden, in_dim), jnp.float32, -s1, s1),
        "b1": jax.random.uniform(k2, (hidden,), jnp.float32, -s1, s1),
        "w2": jax.random.uniform(k3, (hidden, hidden), jnp.float32, -s2, s2),
        "b2": jax.random.uniform(k4, (hidden,), jnp.float32, -s2, s2),
        "w3": jax.random.uniform(k5, (act_dim, hidden), jnp.float32, -s2, s2),
        "b3": jax.random.uniform(k6, (act_dim,), jnp.float32, -s2, s2),
    }


def _ref_f32(x, params):
    h = jnp.maximum(x @ params["w1"].T + params["b1"], 0.0)
    h = jnp.maximum(h @ params["w2"].T + params["b2"], 0.0)
    return h @ params["w3"].T + params["b3"]


def _ref_bf16(x, params):
    w1b = params["w1"].T.astype(jnp.bfloat16)
    w2b = params["w2"].T.astype(jnp.bfloat16)
    w3b = params["w3"].T.astype(jnp.bfloat16)
    h = jnp.maximum(jnp.dot(x.astype(jnp.bfloat16), w1b,
                            preferred_element_type=jnp.float32)
                    + params["b1"], 0.0)
    h = jnp.maximum(jnp.dot(h.astype(jnp.bfloat16), w2b,
                            preferred_element_type=jnp.float32)
                    + params["b2"], 0.0)
    return jnp.dot(h.astype(jnp.bfloat16), w3b,
                   preferred_element_type=jnp.float32) + params["b3"]


if __name__ == "__main__":
    in_dim, hidden, act_dim = 32, 64, 8

    key = jax.random.PRNGKey(0)
    kx, kx2, kp = jax.random.split(key, 3)
    params = init_params(kp, in_dim, hidden, act_dim)
    prep = prepare_params(params)            # one-time: transpose/pad/bf16-cast

    # --- small batch (B=2), force the Pallas path to exercise the kernel -----
    B = 2
    x = jax.random.normal(kx, (B, in_dim), jnp.float32)
    out = policy_head_forward(x, prep, min_pallas_batch=0)
    out = jax.block_until_ready(out)
    assert out.shape == (B, act_dim)
    assert jnp.allclose(out, _ref_bf16(x, params), atol=1e-2, rtol=1e-2)
    assert jnp.allclose(out, _ref_f32(x, params), atol=5e-2, rtol=5e-2)

    # default dispatch at this batch size uses the XLA fast path
    out_fast = jax.block_until_ready(policy_head_forward(x, prep))
    assert out_fast.shape == (B, act_dim)
    assert jnp.allclose(out_fast, _ref_f32(x, params), atol=5e-2, rtol=5e-2)

    # --- larger batch: multi-step grid (2 tiles -> both v7x TCs get work) ----
    B2 = 512
    x2 = jax.random.normal(kx2, (B2, in_dim), jnp.float32)
    out2 = jax.block_until_ready(policy_head_forward(x2, prep, min_pallas_batch=0))
    assert out2.shape == (B2, act_dim)
    assert jnp.allclose(out2, _ref_bf16(x2, params), atol=1e-2, rtol=1e-2)
    assert jnp.allclose(out2, _ref_f32(x2, params), atol=5e-2, rtol=5e-2)

    print("KERNEL_OK")
</pallas_src>

<mosaic_0001>
module attributes {stable_mosaic.version = 11 : i64} {
  func.func @_mlp_policy_kernel(%arg0: i32, %arg1: memref<8x32xf32, #tpu.memory_space<vmem>>, %arg2: memref<32x128xbf16, #tpu.memory_space<vmem>>, %arg3: memref<1x128xf32, #tpu.memory_space<vmem>>, %arg4: memref<128x128xbf16, #tpu.memory_space<vmem>>, %arg5: memref<1x128xf32, #tpu.memory_space<vmem>>, %arg6: memref<128x8xbf16, #tpu.memory_space<vmem>>, %arg7: memref<1x8xf32, #tpu.memory_space<vmem>>, %arg8: memref<8x8xf32, #tpu.memory_space<vmem>>) attributes {dimension_semantics = [#tpu.dimension_semantics<parallel>], iteration_bounds = array<i64: 1>, scalar_prefetch = 0 : i64, scratch_operands = 0 : i64, tpu.core_type = #tpu.core_type<tc>, window_params = [{transform_indices = @transform_0, window_bounds = array<i64: 8, 32>}, {pipeline_mode = #tpu.pipeline_mode<synchronous>, transform_indices = @transform_1, window_bounds = array<i64: 32, 128>}, {pipeline_mode = #tpu.pipeline_mode<synchronous>, transform_indices = @transform_2, window_bounds = array<i64: 1, 128>}, {pipeline_mode = #tpu.pipeline_mode<synchronous>, transform_indices = @transform_3, window_bounds = array<i64: 128, 128>}, {pipeline_mode = #tpu.pipeline_mode<synchronous>, transform_indices = @transform_4, window_bounds = array<i64: 1, 128>}, {pipeline_mode = #tpu.pipeline_mode<synchronous>, transform_indices = @transform_5, window_bounds = array<i64: 128, 8>}, {pipeline_mode = #tpu.pipeline_mode<synchronous>, transform_indices = @transform_6, window_bounds = array<i64: 1, 8>}, {transform_indices = @transform_7, window_bounds = array<i64: 8, 8>}]} {
    %c0 = arith.constant 0 : index
    %c0_0 = arith.constant 0 : index
    %0 = vector.load %arg1[%c0, %c0_0] : memref<8x32xf32, #tpu.memory_space<vmem>>, vector<8x32xf32>
    %1 = arith.truncf %0 : vector<8x32xf32> to vector<8x32xbf16>
    %c0_1 = arith.constant 0 : index
    %c0_2 = arith.constant 0 : index
    %2 = vector.load %arg2[%c0_1, %c0_2] : memref<32x128xbf16, #tpu.memory_space<vmem>>, vector<32x128xbf16>
    %cst = arith.constant dense<0.000000e+00> : vector<8x128xf32>
    %3 = tpu.matmul %1, %2, %cst {dimension_numbers = #tpu.dot_dimension_numbers<[1], [0], [0], [1], [0, 0, 1, 1], [], []>} : vector<8x32xbf16>, vector<32x128xbf16>, vector<8x128xf32> -> vector<8x128xf32>
    %c0_3 = arith.constant 0 : index
    %c0_4 = arith.constant 0 : index
    %4 = vector.load %arg3[%c0_3, %c0_4] : memref<1x128xf32, #tpu.memory_space<vmem>>, vector<1x128xf32>
    %5 = vector.broadcast %4 : vector<1x128xf32> to vector<8x128xf32>
    %6 = arith.addf %3, %5 : vector<8x128xf32>
    %cst_5 = arith.constant 0.000000e+00 : f32
    %7 = vector.broadcast %cst_5 : f32 to vector<8x128xf32>
    %8 = arith.maximumf %6, %7 : vector<8x128xf32>
    %9 = arith.truncf %8 : vector<8x128xf32> to vector<8x128xbf16>
    %c0_6 = arith.constant 0 : index
    %c0_7 = arith.constant 0 : index
    %10 = vector.load %arg4[%c0_6, %c0_7] : memref<128x128xbf16, #tpu.memory_space<vmem>>, vector<128x128xbf16>
    %cst_8 = arith.constant dense<0.000000e+00> : vector<8x128xf32>
    %11 = tpu.matmul %9, %10, %cst_8 {dimension_numbers = #tpu.dot_dimension_numbers<[1], [0], [0], [1], [0, 0, 1, 1], [], []>} : vector<8x128xbf16>, vector<128x128xbf16>, vector<8x128xf32> -> vector<8x128xf32>
    %c0_9 = arith.constant 0 : index
    %c0_10 = arith.constant 0 : index
    %12 = vector.load %arg5[%c0_9, %c0_10] : memref<1x128xf32, #tpu.memory_space<vmem>>, vector<1x128xf32>
    %13 = vector.broadcast %12 : vector<1x128xf32> to vector<8x128xf32>
    %14 = arith.addf %11, %13 : vector<8x128xf32>
    %cst_11 = arith.constant 0.000000e+00 : f32
    %15 = vector.broadcast %cst_11 : f32 to vector<8x128xf32>
    %16 = arith.maximumf %14, %15 : vector<8x128xf32>
    %17 = arith.truncf %16 : vector<8x128xf32> to vector<8x128xbf16>
    %c0_12 = arith.constant 0 : index
    %c0_13 = arith.constant 0 : index
    %18 = vector.load %arg6[%c0_12, %c0_13] : memref<128x8xbf16, #tpu.memory_space<vmem>>, vector<128x8xbf16>
    %cst_14 = arith.constant dense<0.000000e+00> : vector<8x8xf32>
    %19 = tpu.matmul %17, %18, %cst_14 {dimension_numbers = #tpu.dot_dimension_numbers<[1], [0], [0], [1], [0, 0, 1, 1], [], []>} : vector<8x128xbf16>, vector<128x8xbf16>, vector<8x8xf32> -> vector<8x8xf32>
    %c0_15 = arith.constant 0 : index
    %c0_16 = arith.constant 0 : index
    %20 = vector.load %arg7[%c0_15, %c0_16] : memref<1x8xf32, #tpu.memory_space<vmem>>, vector<1x8xf32>
    %21 = vector.broadcast %20 : vector<1x8xf32> to vector<8x8xf32>
    %22 = arith.addf %19, %21 : vector<8x8xf32>
    %c0_17 = arith.constant 0 : index
    %c0_18 = arith.constant 0 : index
    %23 = vector.load %arg8[%c0_17, %c0_18] : memref<8x8xf32, #tpu.memory_space<vmem>>, vector<8x8xf32>
    tpu.vector_store %arg8[%c0_17, %c0_18], %22 {strides = array<i32>} : memref<8x8xf32, #tpu.memory_space<vmem>>, vector<8x8xf32>,
    return
  }
  func.func @transform_0(%arg0: i32) -> (i32, i32) {
    %c0_i32 = arith.constant 0 : i32
    %c0_i32_0 = arith.constant 0 : i32
    return %arg0, %c0_i32 : i32, i32
  }
  func.func @transform_1(%arg0: i32) -> (i32, i32) {
    %c0_i32 = arith.constant 0 : i32
    %c0_i32_0 = arith.constant 0 : i32
    %c0_i32_1 = arith.constant 0 : i32
    return %c0_i32, %c0_i32_0 : i32, i32
  }
  func.func @transform_2(%arg0: i32) -> (i32, i32) {
    %c0_i32 = arith.constant 0 : i32
    %c0_i32_0 = arith.constant 0 : i32
    %c0_i32_1 = arith.constant 0 : i32
    return %c0_i32, %c0_i32_0 : i32, i32
  }
  func.func @transform_3(%arg0: i32) -> (i32, i32) {
    %c0_i32 = arith.constant 0 : i32
    %c0_i32_0 = arith.constant 0 : i32
    %c0_i32_1 = arith.constant 0 : i32
    return %c0_i32, %c0_i32_0 : i32, i32
  }
  func.func @transform_4(%arg0: i32) -> (i32, i32) {
    %c0_i32 = arith.constant 0 : i32
    %c0_i32_0 = arith.constant 0 : i32
    %c0_i32_1 = arith.constant 0 : i32
    return %c0_i32, %c0_i32_0 : i32, i32
  }
  func.func @transform_5(%arg0: i32) -> (i32, i32) {
    %c0_i32 = arith.constant 0 : i32
    %c0_i32_0 = arith.constant 0 : i32
    %c0_i32_1 = arith.constant 0 : i32
    return %c0_i32, %c0_i32_0 : i32, i32
  }
  func.func @transform_6(%arg0: i32) -> (i32, i32) {
    %c0_i32 = arith.constant 0 : i32
    %c0_i32_0 = arith.constant 0 : i32
    %c0_i32_1 = arith.constant 0 : i32
    return %c0_i32, %c0_i32_0 : i32, i32
  }
  func.func @transform_7(%arg0: i32) -> (i32, i32) {
    %c0_i32 = arith.constant 0 : i32
    %c0_i32_0 = arith.constant 0 : i32
    return %arg0, %c0_i32 : i32, i32
  }
}

</mosaic_0001>

<llo_original>
// kernel: tpu_custom_call.1
$region0: #{tpu_custom_call.1}
  #allocation0 [shape = 'u32[]', space=smem, size = 0x4, offset = 0x4, fixed_abs, tag = 'smem constant byte address 0x4 - core index']
  #allocation1 [shape = 'u32[72,128]{1,0:T(1,128)}', space=vmem, size = 0x9000, scoped, tag = 'internal scratch']
  %s0 = inlined_call_operand.hbm [shape: f32[8,32], index: 0, kind: input, shape index: {}]
  %s1 = inlined_call_operand.hbm [shape: bf16[32,128], index: 1, kind: input, shape index: {}]
  %s2 = inlined_call_operand.vmem [shape: f32[1,128], index: 2, kind: input, shape index: {}]
  %s3 = inlined_call_operand.vmem [shape: bf16[128,128], index: 3, kind: input, shape index: {}]
  %s4 = inlined_call_operand.vmem [shape: f32[1,128], index: 4, kind: input, shape index: {}]
  %s5 = inlined_call_operand.vmem [shape: bf16[128,8], index: 5, kind: input, shape index: {}]
  %s6 = inlined_call_operand.vmem [shape: f32[1,8], index: 6, kind: input, shape index: {}]
  %s7 = inlined_call_operand.hbm [shape: f32[8,8], index: 7, kind: output, shape index: {}]
  %s8 = sld [smem:[#allocation0]]
  $region46: #{tpu_custom_call.1} parent=0
    _
  %s10 = ssub.s32 1, %s8
  %s11 = scalar_select 0, %s10, %s8
  $region1: #{tpu_custom_call.1} parent=0
    #allocation2 [shape = 'u8[4096]{0}', space=vmem, size = 0x1000, scoped, tag = 'input window, operand 0, single buffered']
    #allocation3 [shape = 's32[1]{0}', space=sflag, size = 0x4, scoped, tag = 'scoped memory for tpu_custom_call.1']
    #allocation4 [shape = 's32[1]{0}', space=sflag, size = 0x4, scoped, tag = 'scoped memory for tpu_custom_call.1']
    #allocation5 [shape = 'u8[8192]{0}', space=vmem, size = 0x2000, scoped, tag = 'input window, operand 1, single buffered']
    #allocation6 [shape = 's32[1]{0}', space=sflag, size = 0x4, scoped, tag = 'scoped memory for tpu_custom_call.1']
    #allocation7 [shape = 'u8[4096]{0}', space=vmem, size = 0x1000, scoped, tag = 'output window, operand 0, single buffered']
    %12 = vsyncpa [#allocation3], 0
    %13 = vsyncpa [#allocation6], 0
    %14 = vsyncpa [#allocation4], 0
    // Predicated region
    $region2: #{tpu_custom_call.1} parent=1 // pred_check
      _
    $region3: #{tpu_custom_call.1} parent=1 // pred_check_branch
      %16 = sbr.rel (0) target = $region5
    $region4: #{tpu_custom_call.1} parent=1 // pred_region
      %18 = vsyncadd [#allocation3], 0
      %s20 = sshll.u32 %s0, 4
      %s21 = int_to_ptr.hbm [resolvable:$true] %s20
      %s22 = sshll.u32 [#allocation2], 4
      %s23 = int_to_ptr.vmem [resolvable:$true] %s22
      %25 = dma.hbm_to_vmem [thread:$0]  %s21, 128, %s23, [#allocation3]
    $region5: #{tpu_custom_call.1} parent=1 // pred_fallthru
      _
    // Predicated region
    $region6: #{tpu_custom_call.1} parent=1 // pred_check
      _
    $region7: #{tpu_custom_call.1} parent=1 // pred_check_branch
      %27 = sbr.rel (0) target = $region9
    $region8: #{tpu_custom_call.1} parent=1 // pred_region
      %29 = vsyncadd [#allocation6], 0
      %s30 = sshll.u32 %s1, 4
      %s31 = int_to_ptr.hbm [resolvable:$true] %s30
      %s32 = sshll.u32 [#allocation5], 4
      %s33 = int_to_ptr.vmem [resolvable:$true] %s32
      %38 = dma.hbm_to_vmem [thread:$0]  %s31, 256, %s33, [#allocation6], 64, 64, 4
    $region9: #{tpu_custom_call.1} parent=1 // pred_fallthru
      _
    // Predicated region
    $region10: #{tpu_custom_call.1} parent=1 // pred_check
      _
    $region11: #{tpu_custom_call.1} parent=1 // pred_check_branch
      %40 = sbr.rel (0) target = $region13
    $region12: #{tpu_custom_call.1} parent=1 // pred_region
      _
    $region13: #{tpu_custom_call.1} parent=1 // pred_fallthru
      _
    // Predicated region
    $region14: #{tpu_custom_call.1} parent=1 // pred_check
      _
    $region15: #{tpu_custom_call.1} parent=1 // pred_check_branch
      %42 = sbr.rel (0) target = $region17
    $region16: #{tpu_custom_call.1} parent=1 // pred_region
      _
    $region17: #{tpu_custom_call.1} parent=1 // pred_fallthru
      _
    // Predicated region
    $region18: #{tpu_custom_call.1} parent=1 // pred_check
      _
    $region19: #{tpu_custom_call.1} parent=1 // pred_check_branch
      %44 = sbr.rel (0) target = $region21
    $region20: #{tpu_custom_call.1} parent=1 // pred_region
      _
    $region21: #{tpu_custom_call.1} parent=1 // pred_fallthru
      _
    // Predicated region
    $region22: #{tpu_custom_call.1} parent=1 // pred_check
      _
    $region23: #{tpu_custom_call.1} parent=1 // pred_check_branch
      %46 = sbr.rel (0) target = $region25
    $region24: #{tpu_custom_call.1} parent=1 // pred_region
      _
    $region25: #{tpu_custom_call.1} parent=1 // pred_fallthru
      _
    // Predicated region
    $region26: #{tpu_custom_call.1} parent=1 // pred_check
      _
    $region27: #{tpu_custom_call.1} parent=1 // pred_check_branch
      %48 = sbr.rel (0) target = $region29
    $region28: #{tpu_custom_call.1} parent=1 // pred_region
      _
    $region29: #{tpu_custom_call.1} parent=1 // pred_fallthru
      _
    // Predicated region
    $region30: #{tpu_custom_call.1} parent=1 // pred_check
      _
    $region31: #{tpu_custom_call.1} parent=1 // pred_check_branch
      %50 = sbr.rel (0) target = $region33
    $region32: #{tpu_custom_call.1} parent=1 // pred_region
      %52 = dma.done [#allocation3], 128
    $region33: #{tpu_custom_call.1} parent=1 // pred_fallthru
      _
    // Predicated region
    $region34: #{tpu_custom_call.1} parent=1 // pred_check
      _
    $region35: #{tpu_custom_call.1} parent=1 // pred_check_branch
      %54 = sbr.rel (0) target = $region37
    $region36: #{tpu_custom_call.1} parent=1 // pred_region
      %56 = dma.done [#allocation6], 256
    $region37: #{tpu_custom_call.1} parent=1 // pred_fallthru
      _
    %v58 = vld [vmem:[#allocation2] sm:$0xff]
    %v59 = vpack.c.bf16 %v58, %v58
    %v60 = vld [vmem:[#allocation5] sm:$0xf]
    %v61 = vld [vmem:[#allocation5 + $0x4] sm:$0xf]
    %v62 = vld [vmem:[#allocation5 + $0x8] sm:$0xf]
    %v63 = vld [vmem:[#allocation5 + $0xc] sm:$0xf]
    %v64 = vld [vmem:[%s2] sm:$0x1]
    %v66 = vperm.slane %v64, 0
    %v72 = vunpack.c.l.b16 %v60
    %v73 = vunpack.c.l.b16 %v61
    %v74 = vunpack.c.l.b16 %v62
    %v75 = vunpack.c.l.b16 %v63
    %v76 = vpack.c.b16 %v73, %v72
    %v77 = vpack.c.b16 %v75, %v74
    %vm80 = vcmask 261120
    %v82 = vsel %vm80, %v59, 0
    %84 = vmatpush.bf16.msra.mxu0 0
    %85 = vmatpush.bf16.msra.mxu0 0
    %86 = vmatpush.bf16.msra.mxu0 0
    %87 = vmatpush.bf16.msra.mxu0 0
    %88 = vmatpush.bf16.msra.mxu0 0
    %89 = vmatpush.bf16.msra.mxu0 0
    %90 = vmatpush.bf16.msra.mxu0 %v77
    %91 = vmatpush.bf16.msra.mxu0 %v76
    %92 = vmatmul.bf16.gmra.mxu0 %v82
    %v93 = vpop.f32.mrf.mxu0
    %v94 = vadd.f32 %v66, %v93
    %v95 = vpop.f32.mrf.mxu0
    %96 = vdwg.mxu0
    %v97 = vmax.f32 %v94, 0.0
    %v98 = vpack.c.bf16 %v97, %v97
    %v99 = vld [vmem:[%s3] sm:$0xf]
    %v100 = vld [vmem:[%s3 + $0x4] sm:$0xf]
    %v101 = vld [vmem:[%s3 + $0x8] sm:$0xf]
    %v102 = vld [vmem:[%s3 + $0xc] sm:$0xf]
    %v103 = vld [vmem:[%s3 + $0x10] sm:$0xf]
    %v104 = vld [vmem:[%s3 + $0x14] sm:$0xf]
    %v105 = vld [vmem:[%s3 + $0x18] sm:$0xf]
    %v106 = vld [vmem:[%s3 + $0x1c] sm:$0xf]
    %v107 = vld [vmem:[%s3 + $0x20] sm:$0xf]
    %v108 = vld [vmem:[%s3 + $0x24] sm:$0xf]
    %v109 = vld [vmem:[%s3 + $0x28] sm:$0xf]
    %v110 = vld [vmem:[%s3 + $0x2c] sm:$0xf]
    %v111 = vld [vmem:[%s3 + $0x30] sm:$0xf]
    %v112 = vld [vmem:[%s3 + $0x34] sm:$0xf]
    %v113 = vld [vmem:[%s3 + $0x38] sm:$0xf]
    %v114 = vld [vmem:[%s3 + $0x3c] sm:$0xf]
    %v115 = vld [vmem:[%s4] sm:$0x1]
    %v117 = vperm.slane %v115, 0
    %v135 = vunpack.c.l.b16 %v99
    %v136 = vunpack.c.l.b16 %v100
    %v137 = vunpack.c.l.b16 %v101
    %v138 = vunpack.c.l.b16 %v102
    %v139 = vunpack.c.l.b16 %v103
    %v140 = vunpack.c.l.b16 %v104
    %v141 = vunpack.c.l.b16 %v105
    %v142 = vunpack.c.l.b16 %v106
    %v143 = vunpack.c.l.b16 %v107
    %v144 = vunpack.c.l.b16 %v108
    %v145 = vunpack.c.l.b16 %v109
    %v146 = vunpack.c.l.b16 %v110
    %v147 = vunpack.c.l.b16 %v111
    %v148 = vunpack.c.l.b16 %v112
    %v149 = vunpack.c.l.b16 %v113
    %v150 = vunpack.c.l.b16 %v114
    %v151 = vpack.c.b16 %v136, %v135
    %v152 = vpack.c.b16 %v138, %v137
    %v153 = vpack.c.b16 %v140, %v139
    %v154 = vpack.c.b16 %v142, %v141
    %v155 = vpack.c.b16 %v144, %v143
    %v156 = vpack.c.b16 %v146, %v145
    %v157 = vpack.c.b16 %v148, %v147
    %v158 = vpack.c.b16 %v150, %v149
    %167 = vmatpush.bf16.msra.mxu0 %v158
    %168 = vmatpush.bf16.msra.mxu0 %v157
    %169 = vmatpush.bf16.msra.mxu0 %v156
    %170 = vmatpush.bf16.msra.mxu0 %v155
    %171 = vmatpush.bf16.msra.mxu0 %v154
    %172 = vmatpush.bf16.msra.mxu0 %v153
    %173 = vmatpush.bf16.msra.mxu0 %v152
    %174 = vmatpush.bf16.msra.mxu0 %v151
    %175 = vmatmul.bf16.gmra.mxu0 %v98
    %v176 = vpop.f32.mrf.mxu0
    %v177 = vadd.f32 %v117, %v176
    %v178 = vpop.f32.mrf.mxu0
    %179 = vdwg.mxu0
    %v180 = vmax.f32 %v177, 0.0
    %v181 = vpack.c.bf16 %v180, %v180
    %v182 = vld [vmem:[%s5] sm:$0xf]
    %v183 = vld [vmem:[%s5 + $0x4] sm:$0xf]
    %v184 = vld [vmem:[%s5 + $0x8] sm:$0xf]
    %v185 = vld [vmem:[%s5 + $0xc] sm:$0xf]
    %v186 = vld [vmem:[%s5 + $0x10] sm:$0xf]
    %v187 = vld [vmem:[%s5 + $0x14] sm:$0xf]
    %v188 = vld [vmem:[%s5 + $0x18] sm:$0xf]
    %v189 = vld [vmem:[%s5 + $0x1c] sm:$0xf]
    %v190 = vld [vmem:[%s5 + $0x20] sm:$0xf]
    %v191 = vld [vmem:[%s5 + $0x24] sm:$0xf]
    %v192 = vld [vmem:[%s5 + $0x28] sm:$0xf]
    %v193 = vld [vmem:[%s5 + $0x2c] sm:$0xf]
    %v194 = vld [vmem:[%s5 + $0x30] sm:$0xf]
    %v195 = vld [vmem:[%s5 + $0x34] sm:$0xf]
    %v196 = vld [vmem:[%s5 + $0x38] sm:$0xf]
    %v197 = vld [vmem:[%s5 + $0x3c] sm:$0xf]
    %v198 = vld [vmem:[%s6] sm:$0x1]
    %v200 = vperm.slane %v198, 0
    %v218 = vunpack.c.l.b16 %v182
    %v219 = vunpack.c.l.b16 %v183
    %v220 = vunpack.c.l.b16 %v184
    %v221 = vunpack.c.l.b16 %v185
    %v222 = vunpack.c.l.b16 %v186
    %v223 = vunpack.c.l.b16 %v187
    %v224 = vunpack.c.l.b16 %v188
    %v225 = vunpack.c.l.b16 %v189
    %v226 = vunpack.c.l.b16 %v190
    %v227 = vunpack.c.l.b16 %v191
    %v228 = vunpack.c.l.b16 %v192
    %v229 = vunpack.c.l.b16 %v193
    %v230 = vunpack.c.l.b16 %v194
    %v231 = vunpack.c.l.b16 %v195
    %v232 = vunpack.c.l.b16 %v196
    %v233 = vunpack.c.l.b16 %v197
    %v234 = vpack.c.b16 %v219, %v218
    %v235 = vpack.c.b16 %v221, %v220
    %v236 = vpack.c.b16 %v223, %v222
    %v237 = vpack.c.b16 %v225, %v224
    %v238 = vpack.c.b16 %v227, %v226
    %v239 = vpack.c.b16 %v229, %v228
    %v240 = vpack.c.b16 %v231, %v230
    %v241 = vpack.c.b16 %v233, %v232
    %250 = vmatpush.bf16.msra.mxu0 %v241
    %251 = vmatpush.bf16.msra.mxu0 %v240
    %252 = vmatpush.bf16.msra.mxu0 %v239
    %253 = vmatpush.bf16.msra.mxu0 %v238
    %254 = vmatpush.bf16.msra.mxu0 %v237
    %255 = vmatpush.bf16.msra.mxu0 %v236
    %256 = vmatpush.bf16.msra.mxu0 %v235
    %257 = vmatpush.bf16.msra.mxu0 %v234
    %258 = vmatmul.bf16.gmra.mxu0 %v181
    %v259 = vpop.f32.mrf.mxu0
    %v260 = vadd.f32 %v200, %v259
    %v261 = vpop.f32.mrf.mxu0
    %262 = vdwg.mxu0
    %vm263 = vcmask 64512
    %264 = vst.msk [vmem:[#allocation7] sm:$0xff] %vm263, %v260
    // Predicated region
    $region38: #{tpu_custom_call.1} parent=1 // pred_check
      _
    $region39: #{tpu_custom_call.1} parent=1 // pred_check_branch
      %266 = sbr.rel (0) target = $region41
    $region40: #{tpu_custom_call.1} parent=1 // pred_region
      %268 = vsyncadd [#allocation4], 0
      %s270 = sshll.u32 [#allocation7], 4
      %s271 = int_to_ptr.vmem [resolvable:$true] %s270
      %s272 = sshll.u32 %s7, 4
      %s273 = int_to_ptr.hbm [resolvable:$true] %s272
      %275 = dma.vmem_to_hbm [thread:$0]  %s271, 128, %s273, [#allocation4]
    $region41: #{tpu_custom_call.1} parent=1 // pred_fallthru
      _
    // Predicated region
    $region42: #{tpu_custom_call.1} parent=1 // pred_check
      _
    $region43: #{tpu_custom_call.1} parent=1 // pred_check_branch
      %277 = sbr.rel (0) target = $region45
    $region44: #{tpu_custom_call.1} parent=1 // pred_region
      %279 = dma.done [#allocation4], 128
    $region45: #{tpu_custom_call.1} parent=1 // pred_fallthru
      _
    %280 = vsyncpa [#allocation3], 1
    %281 = vsyncpa [#allocation6], 1
    %282 = vsyncpa [#allocation4], 1

</llo_original>
